<compile_context>
chip_gen: v7x
topology: tpu7x:2x2x1
jax: 0.10.0
libtpu: 0.0.40
codegen_flags: <defaults>
</compile_context>

<pallas_src>
import jax
import jax.numpy as jnp
from jax.experimental import pallas as pl
from jax.experimental.pallas import tpu as pltpu


def _shift_down(v):
    """out[r] = v[r-1]; row 0 is filled with zeros (and re-masked by the caller)."""
    m, p = v.shape
    if m % 8 == 0 and p % 128 == 0:
        # Tile-aligned: use the XLU rotation (separate issue slot from VALU/ld/st); the
        # wrapped-around row is zeroed by the caller's sequence-boundary mask.
        return pltpu.roll(v, 1, 0)
    zrow = jnp.zeros((1, p), v.dtype)
    return jnp.concatenate([zrow, v[: m - 1]], axis=0)


def _shift_up(v):
    """out[r] = v[r+1]; last row is filled with zeros (and re-masked by the caller)."""
    m, p = v.shape
    if m % 8 == 0 and p % 128 == 0:
        return pltpu.roll(v, m - 1, 0)
    zrow = jnp.zeros((1, p), v.dtype)
    return jnp.concatenate([v[1:], zrow], axis=0)


def basic_block_kernel(x_ref, w1s_ref, w2s_ref, br_ref, mf_ref, ml_ref, o_ref):
    # x_ref  : (M, Cin)   M = nb*L rows (nb folded batch elements), channels on lanes
    # w1s_ref: (Cin, 4P)  columns = [conv1 tap0 | tap1(center) | tap2 | residual 1x1]
    # w2s_ref: (P, 3P)    columns = [conv2 tap0 | tap1 | tap2]
    # br_ref : (1, P)     residual bias (f32)
    # mf_ref : (M, 1)     f32 mask: 0 at each sequence's first row (t == 0), else 1
    # ml_ref : (M, 1)     f32 mask: 0 at each sequence's last row (t == L-1), else 1
    # o_ref  : (M, P)
    P = o_ref.shape[-1]

    x = x_ref[...]                               # native/compute dtype; no f32 upcast of operands
    mf = mf_ref[...]
    ml = ml_ref[...]

    # ---- conv1 (k=3, pad=1, no bias) + residual 1x1 fused into ONE MXU pass ----
    y = jnp.dot(x, w1s_ref[...], preferred_element_type=jnp.float32)     # (M, 4P) f32
    h = y[:, P:2 * P]                                                    # center tap
    h = h + _shift_down(y[:, 0:P]) * mf          # h[t] += x[t-1] @ w1[0], masked at t==0
    h = h + _shift_up(y[:, 2 * P:3 * P]) * ml    # h[t] += x[t+1] @ w1[2], masked at t==L-1
    res = y[:, 3 * P:4 * P] + br_ref[...]        # residual 1x1 conv + bias
    h = jnp.maximum(h, 0.0)
    # dropout(p=0.2): identity at inference time.

    # ---- conv2 (k=3, pad=1, no bias) fused into ONE MXU pass ----
    z = jnp.dot(h.astype(w2s_ref.dtype), w2s_ref[...],
                preferred_element_type=jnp.float32)                      # (M, 3P) f32
    out = z[:, P:2 * P] + res
    out = out + _shift_down(z[:, 0:P]) * mf
    out = out + _shift_up(z[:, 2 * P:3 * P]) * ml

    o_ref[...] = jnp.maximum(out, 0.0).astype(o_ref.dtype)


def _pick_batch_tile(N, Cin, P, L):
    """Pick how many batch elements to fold per grid step.

    Goals: (a) amortise the ~0.35us/step pipeline overhead and grow the matmul M dim,
    (b) keep double-buffered tiles far below scoped VMEM on every generation (v7x: 64 MiB
    physical), (c) keep the folded block 8-row aligned for the (8,128) BlockSpec rule,
    (d) keep >= 2 grid steps when possible so both v7x TensorCores get work.
    """
    bytes_per_elem = (Cin + 8 * P) * L * 4          # x tile + f32 temporaries, rough upper bound
    budget = 8 * 1024 * 1024
    best = 1 if (L % 8 == 0) else N                 # unaligned L: fall back to one full block
    for cand in range(1, N + 1):
        if N % cand != 0 or (cand * L) % 8 != 0:
            continue
        if cand * bytes_per_elem > budget:
            break
        if N // cand >= 2 or N == 1:
            best = cand
    return best


def basic_block_forward(x, w1, w2, wr=None, br=None, *, nb=None,
                        compute_dtype=None, channels_last=False):
    """BasicBlock forward (inference).

    x : (N, Cin, L) like the PyTorch module, or (N, L, Cin) if channels_last=True.
    w1: (3, Cin, P), w2: (3, P, P) in (tap, in, out) layout; wr: (Cin, P); br: (P,).
    Pass wr/br only when planes != inplanes (the module applies residual_conv only then);
    otherwise the residual is the identity.  Returns (N, P, L) (or (N, L, P) if channels_last).
    compute_dtype: optional (e.g. jnp.bfloat16) dtype for the MXU operands; accumulation,
    bias add, ReLU and the output stay f32/original dtype.
    """
    if channels_last:
        N, L, Cin = x.shape
        x_nlc = x
    else:
        N, Cin, L = x.shape
        # TODO(synk): keep the surrounding model channels-last (channels_last=True) to drop
        # these two HBM-side transposes; they are the main extra memory traffic left.
        x_nlc = jnp.transpose(x, (0, 2, 1))          # (N, L, Cin)
    P = w1.shape[-1]
    out_dtype = x.dtype

    if wr is None:
        # PyTorch only applies residual_conv when planes != inplanes; identity otherwise.
        assert Cin == P, "identity residual path requires inplanes == planes"
        wr = jnp.eye(Cin, dtype=w1.dtype)
        br = jnp.zeros((P,), dtype=jnp.float32)
    br = jnp.asarray(br, jnp.float32).reshape(1, P)

    if compute_dtype is not None:
        x_nlc = x_nlc.astype(compute_dtype)
        w1 = w1.astype(compute_dtype)
        w2 = w2.astype(compute_dtype)
        wr = wr.astype(compute_dtype)

    # One-time host-side weight prep: all three conv1 taps + the residual 1x1 stacked into a
    # single wide RHS, and the three conv2 taps into another -> 2 MXU passes per block.
    w1s = jnp.concatenate([w1[0], w1[1], w1[2], wr], axis=-1)    # (Cin, 4P)
    w2s = jnp.concatenate([w2[0], w2[1], w2[2]], axis=-1)        # (P, 3P)

    if nb is None:
        nb = _pick_batch_tile(N, Cin, P, L)
    assert N % nb == 0, "nb must divide the batch size"
    assert (nb * L) % 8 == 0 or nb == N, "nb*L must be a multiple of 8 (sublane tile)"

    M = nb * L
    grid = (N // nb,)

    # Per-block row masks that zero the +-1 taps at each sequence's first/last row so the k=3
    # taps cannot leak across folded batch elements (same for every grid step).
    t_in_seq = jnp.arange(M, dtype=jnp.int32) % L
    mask_first = (t_in_seq != 0).astype(jnp.float32).reshape(M, 1)
    mask_last = (t_in_seq != (L - 1)).astype(jnp.float32).reshape(M, 1)

    x_flat = x_nlc.reshape(N * L, Cin)

    out_flat = pl.pallas_call(
        basic_block_kernel,
        out_shape=jax.ShapeDtypeStruct((N * L, P), out_dtype),
        grid=grid,
        in_specs=[
            pl.BlockSpec((M, Cin), lambda i: (i, 0)),       # nb folded batch elements per step
            pl.BlockSpec((Cin, 4 * P), lambda i: (0, 0)),   # fused conv1 + residual weights
            pl.BlockSpec((P, 3 * P), lambda i: (0, 0)),     # fused conv2 weights
            pl.BlockSpec((1, P), lambda i: (0, 0)),         # residual bias
            pl.BlockSpec((M, 1), lambda i: (0, 0)),         # sequence-start mask
            pl.BlockSpec((M, 1), lambda i: (0, 0)),         # sequence-end mask
        ],
        out_specs=pl.BlockSpec((M, P), lambda i: (i, 0)),
        compiler_params=pltpu.CompilerParams(
            dimension_semantics=("parallel",),               # megacore: v7x TCs share the grid
            vmem_limit_bytes=32 * 1024 * 1024,               # explicit; v7x physical VMEM = 64 MiB
        ),
    )(x_flat, w1s, w2s, br, mask_first, mask_last)

    out_nlp = out_flat.reshape(N, L, P)
    return out_nlp if channels_last else jnp.transpose(out_nlp, (0, 2, 1))


def reference_forward(x_ncl, w1, w2, wr, br):
    """Pure-JAX reference with lax conv, matching PyTorch Conv1d semantics."""
    dn = ('NCH', 'OIH', 'NCH')
    wt1 = jnp.transpose(w1, (2, 1, 0))                       # (P, Cin, 3)
    wt2 = jnp.transpose(w2, (2, 1, 0))                       # (P, P, 3)
    wtr = jnp.transpose(wr, (1, 0))[:, :, None]              # (P, Cin, 1)
    h = jax.lax.conv_general_dilated(x_ncl, wt1, (1,), [(1, 1)], dimension_numbers=dn)
    h = jnp.maximum(h, 0.0)
    o = jax.lax.conv_general_dilated(h, wt2, (1,), [(1, 1)], dimension_numbers=dn)
    r = jax.lax.conv_general_dilated(x_ncl, wtr, (1,), [(0, 0)], dimension_numbers=dn)
    r = r + br.reshape(1, -1, 1)
    return jnp.maximum(o + r, 0.0)


if __name__ == "__main__":
    keys = jax.random.split(jax.random.PRNGKey(0), 8)
    # BasicBlock(inplanes=4, planes=8), batch=2, length=16, stride=1, groups=1, eval mode.
    N, Cin, P, L = 2, 4, 8, 16
    x = jax.random.normal(keys[0], (N, Cin, L), dtype=jnp.float32)
    # Kernel-layout parameters (tap, in, out); PyTorch layout would be (out, in, tap).
    w1 = 0.1 * jax.random.normal(keys[1], (3, Cin, P), dtype=jnp.float32)
    w2 = 0.1 * jax.random.normal(keys[2], (3, P, P), dtype=jnp.float32)
    wr = 0.1 * jax.random.normal(keys[3], (Cin, P), dtype=jnp.float32)
    br = 0.1 * jax.random.normal(keys[4], (P,), dtype=jnp.float32)

    ref = jax.block_until_ready(reference_forward(x, w1, w2, wr, br))

    # 1) Default path (planes != inplanes -> residual 1x1 conv + bias), f32.
    out = jax.block_until_ready(basic_block_forward(x, w1, w2, wr, br))
    assert out.shape == (N, P, L), out.shape
    assert jnp.allclose(out, ref, atol=1e-4, rtol=1e-4), float(jnp.max(jnp.abs(out - ref)))

    # 2) Explicit batch folding (nb=2: both elements in one block, boundary masks exercised).
    out_fold = jax.block_until_ready(basic_block_forward(x, w1, w2, wr, br, nb=2))
    assert jnp.allclose(out_fold, ref, atol=1e-4, rtol=1e-4), \
        float(jnp.max(jnp.abs(out_fold - ref)))

    # 3) planes == inplanes -> identity residual (residual_conv not applied), as in the module.
    Ci2 = 8
    x2 = jax.random.normal(keys[5], (N, Ci2, L), dtype=jnp.float32)
    w1b = 0.1 * jax.random.normal(keys[6], (3, Ci2, Ci2), dtype=jnp.float32)
    w2b = 0.1 * jax.random.normal(keys[7], (3, Ci2, Ci2), dtype=jnp.float32)
    out2 = jax.block_until_ready(basic_block_forward(x2, w1b, w2b))
    ref2 = reference_forward(x2, w1b, w2b, jnp.eye(Ci2, dtype=jnp.float32),
                             jnp.zeros((Ci2,), jnp.float32))
    assert jnp.allclose(out2, ref2, atol=1e-4, rtol=1e-4), float(jnp.max(jnp.abs(out2 - ref2)))

    # 4) bf16 MXU operands (f32 accumulation), loose tolerance vs the f32 reference.
    out_bf16 = jax.block_until_ready(
        basic_block_forward(x, w1, w2, wr, br, compute_dtype=jnp.bfloat16))
    assert jnp.allclose(out_bf16, ref, atol=5e-2, rtol=5e-2), \
        float(jnp.max(jnp.abs(out_bf16 - ref)))

    # 5) Transpose-free channels-last I/O path.
    x_nlc = jnp.transpose(x, (0, 2, 1))
    out_nlc = jax.block_until_ready(
        basic_block_forward(x_nlc, w1, w2, wr, br, channels_last=True))
    assert jnp.allclose(jnp.transpose(out_nlc, (0, 2, 1)), ref, atol=1e-4, rtol=1e-4)

    print("KERNEL_OK")
</pallas_src>

<mosaic_0001>
module attributes {stable_mosaic.version = 11 : i64} {
  func.func @basic_block_kernel(%arg0: i32, %arg1: memref<16x4xf32, #tpu.memory_space<vmem>>, %arg2: memref<4x32xf32, #tpu.memory_space<vmem>>, %arg3: memref<8x24xf32, #tpu.memory_space<vmem>>, %arg4: memref<1x8xf32, #tpu.memory_space<vmem>>, %arg5: memref<16x1xf32, #tpu.memory_space<vmem>>, %arg6: memref<16x1xf32, #tpu.memory_space<vmem>>, %arg7: memref<16x8xf32, #tpu.memory_space<vmem>>) attributes {dimension_semantics = [#tpu.dimension_semantics<parallel>], iteration_bounds = array<i64: 2>, scalar_prefetch = 0 : i64, scratch_operands = 0 : i64, tpu.core_type = #tpu.core_type<tc>, window_params = [{transform_indices = @transform_0, window_bounds = array<i64: 16, 4>}, {pipeline_mode = #tpu.pipeline_mode<synchronous>, transform_indices = @transform_1, window_bounds = array<i64: 4, 32>}, {pipeline_mode = #tpu.pipeline_mode<synchronous>, transform_indices = @transform_2, window_bounds = array<i64: 8, 24>}, {pipeline_mode = #tpu.pipeline_mode<synchronous>, transform_indices = @transform_3, window_bounds = array<i64: 1, 8>}, {pipeline_mode = #tpu.pipeline_mode<synchronous>, transform_indices = @transform_4, window_bounds = array<i64: 16, 1>}, {pipeline_mode = #tpu.pipeline_mode<synchronous>, transform_indices = @transform_5, window_bounds = array<i64: 16, 1>}, {transform_indices = @transform_6, window_bounds = array<i64: 16, 8>}]} {
    %c0 = arith.constant 0 : index
    %c0_0 = arith.constant 0 : index
    %0 = vector.load %arg1[%c0, %c0_0] : memref<16x4xf32, #tpu.memory_space<vmem>>, vector<16x4xf32>
    %c0_1 = arith.constant 0 : index
    %c0_2 = arith.constant 0 : index
    %1 = vector.load %arg5[%c0_1, %c0_2] : memref<16x1xf32, #tpu.memory_space<vmem>>, vector<16x1xf32>
    %c0_3 = arith.constant 0 : index
    %c0_4 = arith.constant 0 : index
    %2 = vector.load %arg6[%c0_3, %c0_4] : memref<16x1xf32, #tpu.memory_space<vmem>>, vector<16x1xf32>
    %c0_5 = arith.constant 0 : index
    %c0_6 = arith.constant 0 : index
    %3 = vector.load %arg2[%c0_5, %c0_6] : memref<4x32xf32, #tpu.memory_space<vmem>>, vector<4x32xf32>
    %cst = arith.constant dense<0.000000e+00> : vector<16x32xf32>
    %4 = tpu.matmul %0, %3, %cst {dimension_numbers = #tpu.dot_dimension_numbers<[1], [0], [0], [1], [0, 0, 1, 1], [], []>} : vector<16x4xf32>, vector<4x32xf32>, vector<16x32xf32> -> vector<16x32xf32>
    %5 = vector.extract_strided_slice %4 {offsets = [0, 8], sizes = [16, 8], strides = [1, 1]} : vector<16x32xf32> to vector<16x8xf32>
    %6 = vector.extract_strided_slice %4 {offsets = [0, 0], sizes = [16, 8], strides = [1, 1]} : vector<16x32xf32> to vector<16x8xf32>
    %cst_7 = arith.constant 0.000000e+00 : f32
    %7 = vector.broadcast %cst_7 : f32 to vector<1x8xf32>
    %8 = vector.extract_strided_slice %6 {offsets = [0, 0], sizes = [15, 8], strides = [1, 1]} : vector<16x8xf32> to vector<15x8xf32>
    %9 = tpu.concatenate %7, %8 in 0 : vector<1x8xf32>, vector<15x8xf32> -> vector<16x8xf32>
    %10 = vector.broadcast %1 : vector<16x1xf32> to vector<16x8xf32>
    %11 = arith.mulf %9, %10 : vector<16x8xf32>
    %12 = arith.addf %5, %11 : vector<16x8xf32>
    %13 = vector.extract_strided_slice %4 {offsets = [0, 16], sizes = [16, 8], strides = [1, 1]} : vector<16x32xf32> to vector<16x8xf32>
    %cst_8 = arith.constant 0.000000e+00 : f32
    %14 = vector.broadcast %cst_8 : f32 to vector<1x8xf32>
    %15 = vector.extract_strided_slice %13 {offsets = [1, 0], sizes = [15, 8], strides = [1, 1]} : vector<16x8xf32> to vector<15x8xf32>
    %16 = tpu.concatenate %15, %14 in 0 : vector<15x8xf32>, vector<1x8xf32> -> vector<16x8xf32>
    %17 = vector.broadcast %2 : vector<16x1xf32> to vector<16x8xf32>
    %18 = arith.mulf %16, %17 : vector<16x8xf32>
    %19 = arith.addf %12, %18 : vector<16x8xf32>
    %20 = vector.extract_strided_slice %4 {offsets = [0, 24], sizes = [16, 8], strides = [1, 1]} : vector<16x32xf32> to vector<16x8xf32>
    %c0_9 = arith.constant 0 : index
    %c0_10 = arith.constant 0 : index
    %21 = vector.load %arg4[%c0_9, %c0_10] : memref<1x8xf32, #tpu.memory_space<vmem>>, vector<1x8xf32>
    %22 = vector.broadcast %21 : vector<1x8xf32> to vector<16x8xf32>
    %23 = arith.addf %20, %22 : vector<16x8xf32>
    %cst_11 = arith.constant 0.000000e+00 : f32
    %24 = vector.broadcast %cst_11 : f32 to vector<16x8xf32>
    %25 = arith.maximumf %19, %24 : vector<16x8xf32>
    %c0_12 = arith.constant 0 : index
    %c0_13 = arith.constant 0 : index
    %26 = vector.load %arg3[%c0_12, %c0_13] : memref<8x24xf32, #tpu.memory_space<vmem>>, vector<8x24xf32>
    %cst_14 = arith.constant dense<0.000000e+00> : vector<16x24xf32>
    %27 = tpu.matmul %25, %26, %cst_14 {dimension_numbers = #tpu.dot_dimension_numbers<[1], [0], [0], [1], [0, 0, 1, 1], [], []>} : vector<16x8xf32>, vector<8x24xf32>, vector<16x24xf32> -> vector<16x24xf32>
    %28 = vector.extract_strided_slice %27 {offsets = [0, 8], sizes = [16, 8], strides = [1, 1]} : vector<16x24xf32> to vector<16x8xf32>
    %29 = arith.addf %28, %23 : vector<16x8xf32>
    %30 = vector.extract_strided_slice %27 {offsets = [0, 0], sizes = [16, 8], strides = [1, 1]} : vector<16x24xf32> to vector<16x8xf32>
    %cst_15 = arith.constant 0.000000e+00 : f32
    %31 = vector.broadcast %cst_15 : f32 to vector<1x8xf32>
    %32 = vector.extract_strided_slice %30 {offsets = [0, 0], sizes = [15, 8], strides = [1, 1]} : vector<16x8xf32> to vector<15x8xf32>
    %33 = tpu.concatenate %31, %32 in 0 : vector<1x8xf32>, vector<15x8xf32> -> vector<16x8xf32>
    %34 = vector.broadcast %1 : vector<16x1xf32> to vector<16x8xf32>
    %35 = arith.mulf %33, %34 : vector<16x8xf32>
    %36 = arith.addf %29, %35 : vector<16x8xf32>
    %37 = vector.extract_strided_slice %27 {offsets = [0, 16], sizes = [16, 8], strides = [1, 1]} : vector<16x24xf32> to vector<16x8xf32>
    %cst_16 = arith.constant 0.000000e+00 : f32
    %38 = vector.broadcast %cst_16 : f32 to vector<1x8xf32>
    %39 = vector.extract_strided_slice %37 {offsets = [1, 0], sizes = [15, 8], strides = [1, 1]} : vector<16x8xf32> to vector<15x8xf32>
    %40 = tpu.concatenate %39, %38 in 0 : vector<15x8xf32>, vector<1x8xf32> -> vector<16x8xf32>
    %41 = vector.broadcast %2 : vector<16x1xf32> to vector<16x8xf32>
    %42 = arith.mulf %40, %41 : vector<16x8xf32>
    %43 = arith.addf %36, %42 : vector<16x8xf32>
    %cst_17 = arith.constant 0.000000e+00 : f32
    %44 = vector.broadcast %cst_17 : f32 to vector<16x8xf32>
    %45 = arith.maximumf %43, %44 : vector<16x8xf32>
    %c0_18 = arith.constant 0 : index
    %c0_19 = arith.constant 0 : index
    %46 = vector.load %arg7[%c0_18, %c0_19] : memref<16x8xf32, #tpu.memory_space<vmem>>, vector<16x8xf32>
    tpu.vector_store %arg7[%c0_18, %c0_19], %45 {strides = array<i32>} : memref<16x8xf32, #tpu.memory_space<vmem>>, vector<16x8xf32>,
    return
  }
  func.func @transform_0(%arg0: i32) -> (i32, i32) {
    %c0_i32 = arith.constant 0 : i32
    %c0_i32_0 = arith.constant 0 : i32
    return %arg0, %c0_i32 : i32, i32
  }
  func.func @transform_1(%arg0: i32) -> (i32, i32) {
    %c0_i32 = arith.constant 0 : i32
    %c0_i32_0 = arith.constant 0 : i32
    %c0_i32_1 = arith.constant 0 : i32
    return %c0_i32, %c0_i32_0 : i32, i32
  }
  func.func @transform_2(%arg0: i32) -> (i32, i32) {
    %c0_i32 = arith.constant 0 : i32
    %c0_i32_0 = arith.constant 0 : i32
    %c0_i32_1 = arith.constant 0 : i32
    return %c0_i32, %c0_i32_0 : i32, i32
  }
  func.func @transform_3(%arg0: i32) -> (i32, i32) {
    %c0_i32 = arith.constant 0 : i32
    %c0_i32_0 = arith.constant 0 : i32
    %c0_i32_1 = arith.constant 0 : i32
    return %c0_i32, %c0_i32_0 : i32, i32
  }
  func.func @transform_4(%arg0: i32) -> (i32, i32) {
    %c0_i32 = arith.constant 0 : i32
    %c0_i32_0 = arith.constant 0 : i32
    %c0_i32_1 = arith.constant 0 : i32
    return %c0_i32, %c0_i32_0 : i32, i32
  }
  func.func @transform_5(%arg0: i32) -> (i32, i32) {
    %c0_i32 = arith.constant 0 : i32
    %c0_i32_0 = arith.constant 0 : i32
    %c0_i32_1 = arith.constant 0 : i32
    return %c0_i32, %c0_i32_0 : i32, i32
  }
  func.func @transform_6(%arg0: i32) -> (i32, i32) {
    %c0_i32 = arith.constant 0 : i32
    %c0_i32_0 = arith.constant 0 : i32
    return %arg0, %c0_i32 : i32, i32
  }
}

</mosaic_0001>

<llo_original>
// kernel: tpu_custom_call.1
$region0: #{tpu_custom_call.1}
  #allocation0 [shape = 'u32[]', space=smem, size = 0x4, offset = 0x4, fixed_abs, tag = 'smem constant byte address 0x4 - core index']
  #allocation1 [shape = 'u32[144,128]{1,0:T(1,128)}', space=vmem, size = 0x12000, scoped, tag = 'internal scratch']
  %s0 = inlined_call_operand.vmem [shape: f32[32,4], index: 0, kind: input, shape index: {}]
  %s1 = inlined_call_operand.vmem [shape: f32[4,32], index: 1, kind: input, shape index: {}]
  %s2 = inlined_call_operand.vmem [shape: f32[8,24], index: 2, kind: input, shape index: {}]
  %s3 = inlined_call_operand.vmem [shape: f32[1,8], index: 3, kind: input, shape index: {}]
  %s4 = inlined_call_operand.vmem [shape: f32[16,1], index: 4, kind: input, shape index: {}]
  %s5 = inlined_call_operand.vmem [shape: f32[16,1], index: 5, kind: input, shape index: {}]
  %s6 = inlined_call_operand.vmem [shape: f32[32,8], index: 6, kind: output, shape index: {}]
  %s7 = sld [smem:[#allocation0]]
  $region57: #{tpu_custom_call.1} parent=0
    _
  %s9 = ssub.s32 1, %s7
  %s10 = scalar_select 0, %s9, %s7
  loop: start=0, step=1, limit=4
  $region2: #{tpu_custom_call.1} parent=0 // loop_pre_header
    _
  $region3: #{tpu_custom_call.1} parent=0 // loop_header
    %s12 = sphi 0, %s16
    %p13 = scmp.ge.s32.totalorder %s12, 4
    %s22 = sphi 0, %s24
    %s25 = sphi 0, %s22
    %s26 = sphi 0, %s25
    %s42 = sphi 0, %s26
    %s46 = sphi 0, %s46
    %s48 = sphi 0, %s46
    %s49 = sphi 0, %s48
    %s63 = sphi 0, %s49
    %s67 = sphi 0, %s67
    %s69 = sphi 0, %s67
    %s70 = sphi 0, %s69
    %s84 = sphi 0, %s70
    %s88 = sphi 0, %s88
    %s90 = sphi 0, %s88
    %s91 = sphi 0, %s90
    %s105 = sphi 0, %s91
    %s109 = sphi 0, %s109
    %s111 = sphi 0, %s109
    %s112 = sphi 0, %s111
    %s126 = sphi 0, %s112
    %s130 = sphi 0, %s130
    %s132 = sphi 0, %s130
    %s133 = sphi 0, %s132
    %s147 = sphi 0, %s133
    %s153 = sphi 0, %s155
    %s156 = sphi 0, %s153
    %s157 = sphi 0, %s156
    %s173 = sphi 0, %s157
  $region4: #{tpu_custom_call.1} parent=0 // loop_header_branch
    %15 = sbr.rel (%p13) target = $region8
  $region5: #{tpu_custom_call.1} parent=0 // loop_body
    %s17 = ssub.s32 %s12, 1
    %s18 = ssub.s32 %s12, 2
    %s19 = sadd.s32 %s12, 1
    %s20 = ssub.s32 %s12, %s19
    %p21 = scmp.eq.s32.totalorder %s20, 0
    %s23 = sadd.s32 %s22, 1
    %s24 = scalar_select %p21, %s22, %s23
    %p27 = pneg %p21
    %p28 = scmp.eq.s32.totalorder %s12, 1
    %p29 = por %p27, %p28
    %p30 = scmp.ne.s32.totalorder %s22, %s25
    %p31 = scmp.eq.s32.totalorder %s12, 0
    %p32 = por %p30, %p31
    %p33 = scmp.ne.s32.totalorder %s22, %s25
    %p34 = scmp.eq.s32.totalorder %s17, 1
    %p35 = por %p33, %p34
    %p36 = scmp.ne.s32.totalorder %s25, %s26
    %p37 = scmp.eq.s32.totalorder %s17, 0
    %p38 = por %p36, %p37
    %p39 = scmp.ne.s32.totalorder %s25, %s26
    %p40 = scmp.eq.s32.totalorder %s18, 1
    %p41 = por %p39, %p40
    %p43 = scmp.ne.s32.totalorder %s26, %s42
    %p44 = scmp.eq.s32.totalorder %s18, 0
    %p45 = por %p43, %p44
    %s47 = sadd.s32 %s46, 1
    %p50 = scmp.eq.s32.totalorder %s12, 1
    %p51 = scmp.ne.s32.totalorder %s46, %s48
    %p52 = scmp.eq.s32.totalorder %s12, 0
    %p53 = por %p51, %p52
    %p54 = scmp.ne.s32.totalorder %s46, %s48
    %p55 = scmp.eq.s32.totalorder %s17, 1
    %p56 = por %p54, %p55
    %p57 = scmp.ne.s32.totalorder %s48, %s49
    %p58 = scmp.eq.s32.totalorder %s17, 0
    %p59 = por %p57, %p58
    %p60 = scmp.ne.s32.totalorder %s48, %s49
    %p61 = scmp.eq.s32.totalorder %s18, 1
    %p62 = por %p60, %p61
    %p64 = scmp.ne.s32.totalorder %s49, %s63
    %p65 = scmp.eq.s32.totalorder %s18, 0
    %p66 = por %p64, %p65
    %s68 = sadd.s32 %s67, 1
    %p71 = scmp.eq.s32.totalorder %s12, 1
    %p72 = scmp.ne.s32.totalorder %s67, %s69
    %p73 = scmp.eq.s32.totalorder %s12, 0
    %p74 = por %p72, %p73
    %p75 = scmp.ne.s32.totalorder %s67, %s69
    %p76 = scmp.eq.s32.totalorder %s17, 1
    %p77 = por %p75, %p76
    %p78 = scmp.ne.s32.totalorder %s69, %s70
    %p79 = scmp.eq.s32.totalorder %s17, 0
    %p80 = por %p78, %p79
    %p81 = scmp.ne.s32.totalorder %s69, %s70
    %p82 = scmp.eq.s32.totalorder %s18, 1
    %p83 = por %p81, %p82
    %p85 = scmp.ne.s32.totalorder %s70, %s84
    %p86 = scmp.eq.s32.totalorder %s18, 0
    %p87 = por %p85, %p86
    %s89 = sadd.s32 %s88, 1
    %p92 = scmp.eq.s32.totalorder %s12, 1
    %p93 = scmp.ne.s32.totalorder %s88, %s90
    %p94 = scmp.eq.s32.totalorder %s12, 0
    %p95 = por %p93, %p94
    %p96 = scmp.ne.s32.totalorder %s88, %s90
    %p97 = scmp.eq.s32.totalorder %s17, 1
    %p98 = por %p96, %p97
    %p99 = scmp.ne.s32.totalorder %s90, %s91
    %p100 = scmp.eq.s32.totalorder %s17, 0
    %p101 = por %p99, %p100
    %p102 = scmp.ne.s32.totalorder %s90, %s91
    %p103 = scmp.eq.s32.totalorder %s18, 1
    %p104 = por %p102, %p103
    %p106 = scmp.ne.s32.totalorder %s91, %s105
    %p107 = scmp.eq.s32.totalorder %s18, 0
    %p108 = por %p106, %p107
    %s110 = sadd.s32 %s109, 1
    %p113 = scmp.eq.s32.totalorder %s12, 1
    %p114 = scmp.ne.s32.totalorder %s109, %s111
    %p115 = scmp.eq.s32.totalorder %s12, 0
    %p116 = por %p114, %p115
    %p117 = scmp.ne.s32.totalorder %s109, %s111
    %p118 = scmp.eq.s32.totalorder %s17, 1
    %p119 = por %p117, %p118
    %p120 = scmp.ne.s32.totalorder %s111, %s112
    %p121 = scmp.eq.s32.totalorder %s17, 0
    %p122 = por %p120, %p121
    %p123 = scmp.ne.s32.totalorder %s111, %s112
    %p124 = scmp.eq.s32.totalorder %s18, 1
    %p125 = por %p123, %p124
    %p127 = scmp.ne.s32.totalorder %s112, %s126
    %p128 = scmp.eq.s32.totalorder %s18, 0
    %p129 = por %p127, %p128
    %s131 = sadd.s32 %s130, 1
    %p134 = scmp.eq.s32.totalorder %s12, 1
    %p135 = scmp.ne.s32.totalorder %s130, %s132
    %p136 = scmp.eq.s32.totalorder %s12, 0
    %p137 = por %p135, %p136
    %p138 = scmp.ne.s32.totalorder %s130, %s132
    %p139 = scmp.eq.s32.totalorder %s17, 1
    %p140 = por %p138, %p139
    %p141 = scmp.ne.s32.totalorder %s132, %s133
    %p142 = scmp.eq.s32.totalorder %s17, 0
    %p143 = por %p141, %p142
    %p144 = scmp.ne.s32.totalorder %s132, %s133
    %p145 = scmp.eq.s32.totalorder %s18, 1
    %p146 = por %p144, %p145
    %p148 = scmp.ne.s32.totalorder %s133, %s147
    %p149 = scmp.eq.s32.totalorder %s18, 0
    %p150 = por %p148, %p149
    %s151 = ssub.s32 %s12, %s19
    %p152 = scmp.eq.s32.totalorder %s151, 0
    %s154 = sadd.s32 %s153, 1
    %s155 = scalar_select %p152, %s153, %s154
    %p158 = pneg %p152
    %p159 = scmp.eq.s32.totalorder %s12, 1
    %p160 = por %p158, %p159
    %p161 = scmp.ne.s32.totalorder %s153, %s156
    %p162 = scmp.eq.s32.totalorder %s12, 0
    %p163 = por %p161, %p162
    %p164 = scmp.ne.s32.totalorder %s153, %s156
    %p165 = scmp.eq.s32.totalorder %s17, 1
    %p166 = por %p164, %p165
    %p167 = scmp.ne.s32.totalorder %s156, %s157
    %p168 = scmp.eq.s32.totalorder %s17, 0
    %p169 = por %p167, %p168
    %p170 = scmp.ne.s32.totalorder %s156, %s157
    %p171 = scmp.eq.s32.totalorder %s18, 1
    %p172 = por %p170, %p171
    %p174 = scmp.ne.s32.totalorder %s157, %s173
    %p175 = scmp.eq.s32.totalorder %s18, 0
    %p176 = por %p174, %p175
    %p177 = scmp.le.s32.totalorder 1, %s12
    %p178 = scmp.lt.s32.totalorder %s12, 3
    %p179 = pnand %p177, %p178
    %p180 = pneg %p179
    // Predicated region
    $region9: #{tpu_custom_call.1} parent=5 // pred_check
      _
    $region10: #{tpu_custom_call.1} parent=5 // pred_check_branch
      %182 = sbr.rel (%p179) target = $region12
    $region11: #{tpu_custom_call.1} parent=5 // pred_region
      %s183 = ssub.s32 %s12, 1
      // Predicated region
      $region13: #{tpu_custom_call.1} parent=11 // pred_check
        %p184 = pneg %p59
      $region14: #{tpu_custom_call.1} parent=11 // pred_check_branch
        %186 = sbr.rel (%p184) target = $region16
      $region15: #{tpu_custom_call.1} parent=11 // pred_region
        _
      $region16: #{tpu_custom_call.1} parent=11 // pred_fallthru
        _
      // Predicated region
      $region17: #{tpu_custom_call.1} parent=11 // pred_check
        %p187 = pneg %p80
      $region18: #{tpu_custom_call.1} parent=11 // pred_check_branch
        %189 = sbr.rel (%p187) target = $region20
      $region19: #{tpu_custom_call.1} parent=11 // pred_region
        _
      $region20: #{tpu_custom_call.1} parent=11 // pred_fallthru
        _
      // Predicated region
      $region21: #{tpu_custom_call.1} parent=11 // pred_check
        %p190 = pneg %p101
      $region22: #{tpu_custom_call.1} parent=11 // pred_check_branch
        %192 = sbr.rel (%p190) target = $region24
      $region23: #{tpu_custom_call.1} parent=11 // pred_region
        _
      $region24: #{tpu_custom_call.1} parent=11 // pred_fallthru
        _
      // Predicated region
      $region25: #{tpu_custom_call.1} parent=11 // pred_check
        %p193 = pneg %p122
      $region26: #{tpu_custom_call.1} parent=11 // pred_check_branch
        %195 = sbr.rel (%p193) target = $region28
      $region27: #{tpu_custom_call.1} parent=11 // pred_region
        _
      $region28: #{tpu_custom_call.1} parent=11 // pred_fallthru
        _
      // Predicated region
      $region29: #{tpu_custom_call.1} parent=11 // pred_check
        %p196 = pneg %p143
      $region30: #{tpu_custom_call.1} parent=11 // pred_check_branch
        %198 = sbr.rel (%p196) target = $region32
      $region31: #{tpu_custom_call.1} parent=11 // pred_region
        _
      $region32: #{tpu_custom_call.1} parent=11 // pred_fallthru
        _
    $region12: #{tpu_custom_call.1} parent=5 // pred_fallthru
      _
    %p199 = scmp.lt.s32.totalorder %s12, 2
    // Predicated region
    $region33: #{tpu_custom_call.1} parent=5 // pred_check
      %p200 = pneg %p199
    $region34: #{tpu_custom_call.1} parent=5 // pred_check_branch
      %202 = sbr.rel (%p200) target = $region36
    $region35: #{tpu_custom_call.1} parent=5 // pred_region
      // Predicated region
      $region37: #{tpu_custom_call.1} parent=35 // pred_check
        %p203 = pneg %p32
      $region38: #{tpu_custom_call.1} parent=35 // pred_check_branch
        %205 = sbr.rel (%p203) target = $region40
      $region39: #{tpu_custom_call.1} parent=35 // pred_region
        %s206 = smul.u32 2, %s12
        %p207 = scmp.lt.s32.totalorder %s206, 3
        %s208 = scalar_select %p207, %s206, 3
        %s209 = smul.addr %s208, 8
        %s210 = scalar_lea.vmem %s0, %s209
        %s211 = smul.u32 2, %s12
      $region40: #{tpu_custom_call.1} parent=35 // pred_fallthru
        _
    $region36: #{tpu_custom_call.1} parent=5 // pred_fallthru
      _
    %p212 = scmp.le.s32.totalorder 1, %s12
    %p213 = scmp.lt.s32.totalorder %s12, 3
    %p214 = pnand %p212, %p213
    %p215 = pneg %p214
    // Predicated region
    $region41: #{tpu_custom_call.1} parent=5 // pred_check
      _
    $region42: #{tpu_custom_call.1} parent=5 // pred_check_branch
      %217 = sbr.rel (%p214) target = $region44
    $region43: #{tpu_custom_call.1} parent=5 // pred_region
      %s218 = ssub.s32 %s12, 1
      %s219 = smul.u32 2, %s17
      %p220 = scmp.lt.s32.totalorder %s219, 3
      %s221 = scalar_select %p220, %s219, 3
      %s222 = smul.addr %s221, 8
      %s223 = scalar_lea.vmem %s0, %s222
      %p224 = pneg %p38
      %p225 = pneg %p35
      %p226 = pneg %p59
      %p227 = pneg %p56
      %p228 = pneg %p80
      %p229 = pneg %p77
      %p230 = pneg %p101
      %p231 = pneg %p98
      %p232 = pneg %p122
      %p233 = pneg %p119
      %p234 = pneg %p143
      %p235 = pneg %p140
      %p236 = pneg %p169
      %p237 = pneg %p166
      %s238 = smul.u32 2, %s17
      %p239 = scmp.lt.s32.totalorder %s238, 3
      %s240 = scalar_select %p239, %s238, 3
      %s241 = smul.addr %s240, 8
      %s242 = scalar_lea.vmem %s6, %s241
      %s243 = smul.u32 2, %s17
      %p244 = scmp.lt.s32.totalorder %s243, 3
      %s245 = scalar_select %p244, %s243, 3
      %s246 = smul.addr %s245, 8
      %s247 = scalar_lea.vmem %s0, %s246
      %s248 = smul.u32 2, %s17
      %s249 = smul.u32 2, %s17
      %p250 = scmp.lt.s32.totalorder %s249, 3
      %s251 = scalar_select %p250, %s249, 3
      %s252 = smul.addr %s251, 8
      %s253 = scalar_lea.vmem %s6, %s252
      %s254 = smul.u32 2, %s17
      %v255 = vld [vmem:[%s247] sm:$0xff]
      %v256 = vld [vmem:[%s247 + $0x8] sm:$0xff]
      %v257 = vld [vmem:[%s4] sm:$0xff]
      %v258 = vld [vmem:[%s4 + $0x8] sm:$0xff]
      %v259 = vld [vmem:[%s5] sm:$0xff]
      %v260 = vld [vmem:[%s5 + $0x8] sm:$0xff]
      %v261 = vld [vmem:[%s1] sm:$0xf]
      %vm262 = vcmask 31744
      %v264 = vsel %vm262, %v255, 0
      %v267 = vsel %vm262, %v256, 0
      %vm269 = vcmask 1043456
      %v271 = vsel %vm269, %v261, 0
      %273 = vmatprep.subr.mxu0 0.0
      %274 = vmatpush1.msra.mxu0 %v271
      %275 = vmatprep.subr.mxu0 0.0
      %276 = vmatpush1.msra.mxu0 0.0
      %277 = vmatprep.subr.mxu0 0.0
      %278 = vmatpush1.msra.mxu0 0.0
      %279 = vmatprep.subr.mxu0 0.0
      %280 = vmatpush1.msra.mxu0 0.0
      %281 = vmatprep.subr.mxu0 0.0
      %282 = vmatpush1.msra.mxu0 0.0
      %283 = vmatprep.subr.mxu0 0.0
      %284 = vmatpush1.msra.mxu0 0.0
      %285 = vmatprep.subr.mxu0 0.0
      %286 = vmatpush1.msra.mxu0 0.0
      %287 = vmatprep.subr.mxu0 0.0
      %288 = vmatpush1.msra.mxu0 0.0
      %289 = vmatprep.subr.mxu0 0.0
      %290 = vmatpush1.msra.mxu0 0.0
      %291 = vmatprep.subr.mxu0 0.0
      %292 = vmatpush1.msra.mxu0 0.0
      %293 = vmatprep.subr.mxu0 0.0
      %294 = vmatpush1.msra.mxu0 0.0
      %295 = vmatprep.subr.mxu0 0.0
      %296 = vmatpush1.msra.mxu0 0.0
      %297 = vmatprep.subr.mxu0 0.0
      %298 = vmatpush1.msra.mxu0 0.0
      %299 = vmatprep.subr.mxu0 0.0
      %300 = vmatpush1.msra.mxu0 0.0
      %301 = vmatprep.subr.mxu0 0.0
      %302 = vmatpush1.msra.mxu0 0.0
      %303 = vmatprep.subr.mxu0 0.0
      %304 = vmatpush1.msra.mxu0 0.0
      %305 = vmatprep.subr.mxu0 0.0
      %306 = vmatpush1.msra.mxu0 0.0
      %307 = vmatprep.subr.mxu0 0.0
      %308 = vmatpush1.msra.mxu0 0.0
      %309 = vmatprep.subr.mxu0 0.0
      %310 = vmatpush1.msra.mxu0 0.0
      %311 = vmatprep.subr.mxu0 0.0
      %312 = vmatpush1.msra.mxu0 0.0
      %313 = vmatprep.subr.mxu0 0.0
      %314 = vmatpush1.msra.mxu0 0.0
      %315 = vmatprep.subr.mxu0 0.0
      %316 = vmatpush1.msra.mxu0 0.0
      %317 = vmatprep.subr.mxu0 0.0
      %318 = vmatpush1.msra.mxu0 0.0
      %319 = vmatprep.subr.mxu0 0.0
      %320 = vmatpush1.msra.mxu0 0.0
      %321 = vmatprep.subr.mxu0 0.0
      %322 = vmatpush1.msra.mxu0 0.0
      %323 = vmatprep.subr.mxu0 0.0
      %324 = vmatpush1.msra.mxu0 0.0
      %325 = vmatprep.subr.mxu0 0.0
      %326 = vmatpush1.msra.mxu0 0.0
      %327 = vmatprep.subr.mxu0 0.0
      %328 = vmatpush1.msra.mxu0 0.0
      %329 = vmatprep.subr.mxu0 0.0
      %330 = vmatpush1.msra.mxu0 0.0
      %331 = vmatprep.subr.mxu0 0.0
      %332 = vmatpush1.msra.mxu0 0.0
      %333 = vmatprep.subr.mxu0 0.0
      %334 = vmatpush1.msra.mxu0 0.0
      %335 = vmatprep.subr.mxu0 0.0
      %336 = vmatpush1.msra.mxu0 0.0
      %337 = vmatprep.mubr.f32.mxu0 0.0
      %338 = vmatmul.mubr.f32.gmra.mrb[0].mxu0 %v264
      %v339 = vpop.f32.mrb[0].mxu0
      %v340 = vadd.f32 0.0, %v339
      %v341 = vpop.f32.mrb[0].mxu0
      %342 = vmatprep.mubr.f32.mxu0 0.0
      %343 = vmatmul.mubr.f32.gmra.mrb[0].mxu0 %v267
      %v344 = vpop.f32.mrb[0].mxu0
      %v345 = vadd.f32 0.0, %v344
      %v346 = vpop.f32.mrb[0].mxu0
      %347 = vdwg.mxu0
      %vm350 = vcmask 1040384
      %v351 = vrot.slane %v340, 7
      %v352 = vrot.slane %v345, 7
      %v353 = vsel %vm350, %v351, %v352
      %v356 = vsel %vm350, 0.0, %v351
      %358 = vset.pattern.permute.xlu0 0
      %359 = vperm.xlu0 %358, %v257
      %v360 = vpop.permute.xlu0 %359
      %363 = vset.pattern.permute.xlu0 0
      %364 = vperm.xlu0 %363, %v258
      %v365 = vpop.permute.xlu0 %364
      %v367 = vmul.f32 %v356, %v360
      %v368 = vmul.f32 %v353, %v365
      %371 = vrot.lane.b32.xlu0 %v367, 8
      %v372 = vpop.permute.xlu0 %371
      %373 = vrot.lane.b32.xlu0 %v368, 8
      %v374 = vpop.permute.xlu0 %373
      %v377 = vadd.f32 %v340, %v372
      %v378 = vadd.f32 %v345, %v374
      %vm379 = vcmask 1046528
      %v380 = vrot.slane %v340, 1
      %v381 = vrot.slane %v345, 1
      %v382 = vsel %vm379, %v380, %v381
      %v385 = vsel %vm379, %v381, 0.0
      %387 = vset.pattern.permute.xlu0 0
      %388 = vperm.xlu0 %387, %v259
      %v389 = vpop.permute.xlu0 %388
      %392 = vset.pattern.permute.xlu0 0
      %393 = vperm.xlu0 %392, %v260
      %v394 = vpop.permute.xlu0 %393
      %v396 = vmul.f32 %v382, %v389
      %v397 = vmul.f32 %v385, %v394
      %400 = vrot.lane.b32.xlu0 %v396, 120
      %v401 = vpop.permute.xlu0 %400
      %402 = vrot.lane.b32.xlu0 %v397, 120
      %v403 = vpop.permute.xlu0 %402
      %v406 = vadd.f32 %v377, %v401
      %v407 = vadd.f32 %v378, %v403
      %v408 = vld [vmem:[%s3] sm:$0x1]
      %v410 = vlaneseq
      %v411 = vshrl.u32 %v410, 7
      %v412 = vsub.s32 0, %v411
      %v413 = vrot.slane %v408, %v412
      %414 = vrot.lane.b32.xlu0 %v413, 24
      %v415 = vpop.permute.xlu0 %414
      %v417 = vadd.f32 %v340, %v415
      %v418 = vadd.f32 %v345, %v415
      %v419 = vmax.f32 %v406, 0.0
      %v420 = vmax.f32 %v407, 0.0
      %v421 = vld [vmem:[%s2] sm:$0xff]
      %424 = vrot.lane.b32.xlu0 %v419, 120
      %v425 = vpop.permute.xlu0 %424
      %426 = vrot.lane.b32.xlu0 %v420, 120
      %v427 = vpop.permute.xlu0 %426
      %vm428 = vcmask 64512
      %v429 = vsel %vm428, %v425, 0
      %v431 = vsel %vm428, %v427, 0
      %433 = vmatprep.subr.mxu0 0.0
      %434 = vmatpush1.msra.mxu0 %v421
      %435 = vmatprep.subr.mxu0 0.0
      %436 = vmatpush1.msra.mxu0 0.0
      %437 = vmatprep.subr.mxu0 0.0
      %438 = vmatpush1.msra.mxu0 0.0
      %439 = vmatprep.subr.mxu0 0.0
      %440 = vmatpush1.msra.mxu0 0.0
      %441 = vmatprep.subr.mxu0 0.0
      %442 = vmatpush1.msra.mxu0 0.0
      %443 = vmatprep.subr.mxu0 0.0
      %444 = vmatpush1.msra.mxu0 0.0
      %445 = vmatprep.subr.mxu0 0.0
      %446 = vmatpush1.msra.mxu0 0.0
      %447 = vmatprep.subr.mxu0 0.0
      %448 = vmatpush1.msra.mxu0 0.0
      %449 = vmatprep.subr.mxu0 0.0
      %450 = vmatpush1.msra.mxu0 0.0
      %451 = vmatprep.subr.mxu0 0.0
      %452 = vmatpush1.msra.mxu0 0.0
      %453 = vmatprep.subr.mxu0 0.0
      %454 = vmatpush1.msra.mxu0 0.0
      %455 = vmatprep.subr.mxu0 0.0
      %456 = vmatpush1.msra.mxu0 0.0
      %457 = vmatprep.subr.mxu0 0.0
      %458 = vmatpush1.msra.mxu0 0.0
      %459 = vmatprep.subr.mxu0 0.0
      %460 = vmatpush1.msra.mxu0 0.0
      %461 = vmatprep.subr.mxu0 0.0
      %462 = vmatpush1.msra.mxu0 0.0
      %463 = vmatprep.subr.mxu0 0.0
      %464 = vmatpush1.msra.mxu0 0.0
      %465 = vmatprep.subr.mxu0 0.0
      %466 = vmatpush1.msra.mxu0 0.0
      %467 = vmatprep.subr.mxu0 0.0
      %468 = vmatpush1.msra.mxu0 0.0
      %469 = vmatprep.subr.mxu0 0.0
      %470 = vmatpush1.msra.mxu0 0.0
      %471 = vmatprep.subr.mxu0 0.0
      %472 = vmatpush1.msra.mxu0 0.0
      %473 = vmatprep.subr.mxu0 0.0
      %474 = vmatpush1.msra.mxu0 0.0
      %475 = vmatprep.subr.mxu0 0.0
      %476 = vmatpush1.msra.mxu0 0.0
      %477 = vmatprep.subr.mxu0 0.0
      %478 = vmatpush1.msra.mxu0 0.0
      %479 = vmatprep.subr.mxu0 0.0
      %480 = vmatpush1.msra.mxu0 0.0
      %481 = vmatprep.subr.mxu0 0.0
      %482 = vmatpush1.msra.mxu0 0.0
      %483 = vmatprep.subr.mxu0 0.0
      %484 = vmatpush1.msra.mxu0 0.0
      %485 = vmatprep.subr.mxu0 0.0
      %486 = vmatpush1.msra.mxu0 0.0
      %487 = vmatprep.subr.mxu0 0.0
      %488 = vmatpush1.msra.mxu0 0.0
      %489 = vmatprep.subr.mxu0 0.0
      %490 = vmatpush1.msra.mxu0 0.0
      %491 = vmatprep.subr.mxu0 0.0
      %492 = vmatpush1.msra.mxu0 0.0
      %493 = vmatprep.subr.mxu0 0.0
      %494 = vmatpush1.msra.mxu0 0.0
      %495 = vmatprep.subr.mxu0 0.0
      %496 = vmatpush1.msra.mxu0 0.0
      %497 = vmatprep.mubr.f32.mxu0 0.0
      %498 = vmatmul.mubr.f32.gmra.mrb[0].mxu0 %v429
      %v499 = vpop.f32.mrb[0].mxu0
      %v500 = vadd.f32 0.0, %v499
      %v501 = vpop.f32.mrb[0].mxu0
      %502 = vmatprep.mubr.f32.mxu0 0.0
      %503 = vmatmul.mubr.f32.gmra.mrb[0].mxu0 %v431
      %v504 = vpop.f32.mrb[0].mxu0
      %v505 = vadd.f32 0.0, %v504
      %v506 = vpop.f32.mrb[0].mxu0
      %507 = vdwg.mxu0
      %510 = vrot.lane.b32.xlu0 %v417, 112
      %v511 = vpop.permute.xlu0 %510
      %512 = vrot.lane.b32.xlu0 %v418, 112
      %v513 = vpop.permute.xlu0 %512
      %v516 = vadd.f32 %v500, %v511
      %v517 = vadd.f32 %v505, %v513
      %v520 = vrot.slane %v500, 7
      %v521 = vrot.slane %v505, 7
      %v522 = vsel %vm350, %v520, %v521
      %v525 = vsel %vm350, 0.0, %v520
      %v526 = vmul.f32 %v525, %v360
      %v527 = vmul.f32 %v522, %v365
      %530 = vrot.lane.b32.xlu0 %v526, 8
      %v531 = vpop.permute.xlu0 %530
      %532 = vrot.lane.b32.xlu0 %v527, 8
      %v533 = vpop.permute.xlu0 %532
      %v536 = vadd.f32 %v516, %v531
      %v537 = vadd.f32 %v517, %v533
      %v538 = vrot.slane %v500, 1
      %v539 = vrot.slane %v505, 1
      %v540 = vsel %vm379, %v538, %v539
      %v543 = vsel %vm379, %v539, 0.0
      %v544 = vmul.f32 %v540, %v389
      %v545 = vmul.f32 %v543, %v394
      %548 = vrot.lane.b32.xlu0 %v544, 120
      %v549 = vpop.permute.xlu0 %548
      %550 = vrot.lane.b32.xlu0 %v545, 120
      %v551 = vpop.permute.xlu0 %550
      %v554 = vadd.f32 %v536, %v549
      %v555 = vadd.f32 %v537, %v551
      %v556 = vmax.f32 %v554, 0.0
      %v557 = vmax.f32 %v555, 0.0
      %560 = vrot.lane.b32.xlu0 %v556, 120
      %v561 = vpop.permute.xlu0 %560
      %562 = vrot.lane.b32.xlu0 %v557, 120
      %v563 = vpop.permute.xlu0 %562
      %566 = vst.msk [vmem:[%s253] sm:$0xff] %vm428, %v561
      %567 = vst.msk [vmem:[%s253 + $0x8] sm:$0xff] %vm428, %v563
      %s568 = smul.u32 2, %s17
      %p569 = scmp.lt.s32.totalorder %s568, 3
      %s570 = scalar_select %p569, %s568, 3
      %s571 = smul.addr %s570, 8
      %s572 = scalar_lea.vmem %s6, %s571
      // Predicated region
      $region45: #{tpu_custom_call.1} parent=43 // pred_check
        %p573 = pneg %p166
      $region46: #{tpu_custom_call.1} parent=43 // pred_check_branch
        %575 = sbr.rel (%p573) target = $region48
      $region47: #{tpu_custom_call.1} parent=43 // pred_region
        %s576 = smul.u32 2, %s17
      $region48: #{tpu_custom_call.1} parent=43 // pred_fallthru
        _
    $region44: #{tpu_custom_call.1} parent=5 // pred_fallthru
      _
    %p577 = scmp.le.s32.totalorder 2, %s12
    // Predicated region
    $region49: #{tpu_custom_call.1} parent=5 // pred_check
      %p578 = pneg %p577
    $region50: #{tpu_custom_call.1} parent=5 // pred_check_branch
      %580 = sbr.rel (%p578) target = $region52
    $region51: #{tpu_custom_call.1} parent=5 // pred_region
      %s581 = ssub.s32 %s12, 2
      // Predicated region
      $region53: #{tpu_custom_call.1} parent=51 // pred_check
        %p582 = pneg %p172
      $region54: #{tpu_custom_call.1} parent=51 // pred_check_branch
        %584 = sbr.rel (%p582) target = $region56
      $region55: #{tpu_custom_call.1} parent=51 // pred_region
        %s585 = smul.u32 2, %s18
        %p586 = scmp.lt.s32.totalorder %s585, 3
        %s587 = scalar_select %p586, %s585, 3
        %s588 = smul.addr %s587, 8
        %s589 = scalar_lea.vmem %s6, %s588
      $region56: #{tpu_custom_call.1} parent=51 // pred_fallthru
        _
    $region52: #{tpu_custom_call.1} parent=5 // pred_fallthru
      _
  $region6: #{tpu_custom_call.1} parent=0 // loop_footer
    %s16 = sadd.s32 1, %s12
  $region7: #{tpu_custom_call.1} parent=0 // loop_footer_branch
    %11 = sbr.rel target = $region3
  $region8: #{tpu_custom_call.1} parent=0 // loop_exit
    _

</llo_original>
